<compile_context>
chip_gen: v7x
topology: tpu7x:2x2x1
jax: 0.10.0
libtpu: 0.0.40
codegen_flags: <defaults>
</compile_context>

<pallas_src>
import functools

import jax
import jax.numpy as jnp
from jax.experimental import pallas as pl
from jax.experimental.pallas import tpu as pltpu


_VMEM_LIMIT_BYTES = 56 * 1024 * 1024   # explicit scoped-VMEM ceiling
_TM_VMEM_BUDGET = 40 * 1024 * 1024     # budget used when deriving the row tile
_TM_MAX = 2048                         # row-tile cap (review: 1024-2048 rows)


def _round_up(x: int, m: int) -> int:
    return ((x + m - 1) // m) * m


# --------------------------------------------------------------------------
# Fused kernel: (Linear -> ReLU) x (L-1) -> Linear, entirely in VMEM/vregs.
# --------------------------------------------------------------------------
def _fused_mlp_kernel(x_ref, *refs, num_layers: int):
    """x_ref: (TM, in_dim) activation tile (compute dtype, e.g. bf16).

    refs: w0, b0, w1, b1, ..., o_ref
        w_l : (in_l, out_pad_l)  weights, transposed vs PyTorch, compute dtype
        b_l : (1, out_pad_l)     bias, f32
    o_ref: (TM, out_pad_last)    f32 output tile (lane-dense, 128-multiple)
    """
    o_ref = refs[-1]
    wb = refs[:-1]

    y = x_ref[...]
    for l in range(num_layers):
        w = wb[2 * l][...]
        b = wb[2 * l + 1][...]
        # bf16 (or f32) operands on the MXU, f32 accumulation.
        acc = jnp.dot(y, w, preferred_element_type=jnp.float32)
        acc = acc + b.astype(jnp.float32)
        if l < num_layers - 1:
            # Running activation stays in the compute dtype between layers.
            y = jnp.maximum(acc, 0.0).astype(w.dtype)
        else:
            y = acc
    o_ref[...] = y.astype(o_ref.dtype)


# --------------------------------------------------------------------------
# pallas_call builder (cached per shape signature).
# --------------------------------------------------------------------------
@functools.lru_cache(maxsize=None)
def _build_fused_mlp(m_pad: int, tm: int, layer_dims, compute_dtype_name: str,
                     single_buffer_weights: bool):
    num_layers = len(layer_dims)
    in_dim = layer_dims[0][0]
    out_pad = layer_dims[-1][1]
    grid = (m_pad // tm,)

    use_single = single_buffer_weights and hasattr(pl, "Buffered")

    def resident_spec(shape):
        # Weights/biases use the same block at every grid step -> keep them
        # resident and single-buffered (no need for a second pipeline buffer).
        if use_single:
            return pl.BlockSpec(shape, lambda i: (0, 0),
                                pipeline_mode=pl.Buffered(1))
        return pl.BlockSpec(shape, lambda i: (0, 0))

    in_specs = [pl.BlockSpec((tm, in_dim), lambda i: (i, 0))]
    for (n_in, n_out) in layer_dims:
        in_specs.append(resident_spec((n_in, n_out)))
        in_specs.append(resident_spec((1, n_out)))
    # TODO(synk): for very small output_dim, measure a masked (TM, out_dim)
    # store variant against this lane-dense padded-128 store.
    out_specs = pl.BlockSpec((tm, out_pad), lambda i: (i, 0))

    kernel = functools.partial(_fused_mlp_kernel, num_layers=num_layers)
    return pl.pallas_call(
        kernel,
        out_shape=jax.ShapeDtypeStruct((m_pad, out_pad), jnp.float32),
        grid=grid,
        in_specs=in_specs,
        out_specs=out_specs,
        compiler_params=pltpu.CompilerParams(
            dimension_semantics=("parallel",),
            vmem_limit_bytes=_VMEM_LIMIT_BYTES),
    )


# --------------------------------------------------------------------------
# Row-tile selection from a VMEM budget.
# --------------------------------------------------------------------------
def _choose_row_tile(m: int, layer_dims, compute_dtype,
                     single_buffer_weights: bool):
    w_itemsize = jnp.dtype(compute_dtype).itemsize
    in_dim = layer_dims[0][0]
    out_pad = layer_dims[-1][1]
    max_w = max(max(n_out for _, n_out in layer_dims), in_dim)

    weight_bytes = 0
    for (n_in, n_out) in layer_dims:
        weight_bytes += n_in * n_out * w_itemsize + n_out * 4  # bias f32
    if not single_buffer_weights:
        weight_bytes *= 2  # double-buffered resident blocks

    per_row = (2 * in_dim * w_itemsize   # double-buffered input tile
               + 2 * out_pad * 4         # double-buffered f32 output tile
               + 2 * max_w * 4)          # f32 intermediates / running act

    avail = _TM_VMEM_BUDGET - weight_bytes
    if avail <= per_row * 8:
        # TODO(synk): add a K/layer-tiled pipeline (grid axis over the hidden
        # dim with an f32 accumulator) for configs whose resident weights blow
        # the VMEM budget, especially on v7x's 64 MiB VMEM.
        raise NotImplementedError(
            "MLP weights too large for the fused resident-weight kernel")

    tm = min(_TM_MAX, avail // per_row)
    tm = max(8, (tm // 8) * 8)

    m8 = _round_up(max(m, 1), 8)
    tm = min(tm, m8)
    # Keep >= 2 grid steps on megacore parts once the problem is big enough,
    # so a huge TM does not collapse the "parallel" axis to a single step.
    if m8 > 1024 and tm >= m8:
        tm = _round_up((m8 + 1) // 2, 8)

    m_pad = _round_up(m8, tm)
    return tm, m_pad


# --------------------------------------------------------------------------
# Jitted forward: pad -> fused pallas_call -> slice -> reshape.
# --------------------------------------------------------------------------
def _mlp_forward(x, *flat_params, layer_dims, out_dim, compute_dtype_name,
                 single_buffer_weights):
    compute_dtype = jnp.dtype(compute_dtype_name)
    in_dim = layer_dims[0][0]
    lead = x.shape[:-1]
    x2d = x.reshape(-1, in_dim)
    m = x2d.shape[0]

    tm, m_pad = _choose_row_tile(m, layer_dims, compute_dtype,
                                 single_buffer_weights)

    x_pad = x2d.astype(compute_dtype)
    if m_pad > m:
        x_pad = jnp.pad(x_pad, ((0, m_pad - m), (0, 0)))

    fn = _build_fused_mlp(m_pad, tm, layer_dims, compute_dtype_name,
                          single_buffer_weights)
    out_padded = fn(x_pad, *flat_params)

    out = out_padded[:m, :out_dim].astype(x.dtype)
    return out.reshape(*lead, out_dim)


# --------------------------------------------------------------------------
# Module wrapper (PyTorch MLP equivalent).
# --------------------------------------------------------------------------
class MLP:
    """JAX/Pallas equivalent of the PyTorch MLP module."""

    def __init__(self, input_dim, hidden_dim, output_dim, num_layers, key,
                 compute_dtype=jnp.bfloat16):
        self.num_layers = num_layers
        self.input_dim = input_dim
        self.output_dim = output_dim
        self.compute_dtype_name = jnp.dtype(compute_dtype).name

        h = [hidden_dim] * (num_layers - 1)
        dims_in = [input_dim] + h
        dims_out = h + [output_dim]

        self.params = []          # unpadded f32 (reference / inspection)
        padded = []               # lane-padded params fed to the kernel
        for li, (n, k) in enumerate(zip(dims_in, dims_out)):
            key, wk, bk = jax.random.split(key, 3)
            # nn.Linear-style uniform(-1/sqrt(fan_in), 1/sqrt(fan_in)) init.
            bound = 1.0 / (n ** 0.5)
            # Stored transposed: (in, out) so the kernel does x @ W.
            w = jax.random.uniform(wk, (n, k), jnp.float32, -bound, bound)
            b = jax.random.uniform(bk, (1, k), jnp.float32, -bound, bound)
            self.params.append((w, b))

            # First layer's input dim is NOT lane-padded (saves input DMA);
            # hidden/output dims are padded to 128 lanes with zeros so padded
            # lanes stay exactly 0 through bias/ReLU and get sliced off.
            n_pad = n if li == 0 else _round_up(n, 128)
            k_pad = _round_up(k, 128)
            w_pad = jnp.zeros((n_pad, k_pad), compute_dtype)
            w_pad = w_pad.at[:n, :k].set(w.astype(compute_dtype))
            b_pad = jnp.zeros((1, k_pad), jnp.float32).at[:, :k].set(b)
            padded.append((w_pad, b_pad))

        self.layer_dims = tuple((wp.shape[0], wp.shape[1]) for wp, _ in padded)
        flat = []
        for wp, bp in padded:
            flat.extend((wp, bp))
        self._flat_padded = tuple(flat)

        self._single_buffer_weights = True
        self._fwd_cache = {}

    def _forward_fn(self, single_buffer: bool):
        if single_buffer not in self._fwd_cache:
            self._fwd_cache[single_buffer] = jax.jit(functools.partial(
                _mlp_forward,
                layer_dims=self.layer_dims,
                out_dim=self.output_dim,
                compute_dtype_name=self.compute_dtype_name,
                single_buffer_weights=single_buffer))
        return self._fwd_cache[single_buffer]

    def __call__(self, x):
        flat = self._flat_padded
        if self._single_buffer_weights:
            try:
                return self._forward_fn(True)(x, *flat)
            except Exception:
                # pl.Buffered(1) not supported by this JAX/Mosaic version:
                # fall back to default (double-buffered) resident weights.
                self._single_buffer_weights = False
        return self._forward_fn(False)(x, *flat)


if __name__ == "__main__":
    key = jax.random.PRNGKey(0)
    pkey, xkey = jax.random.split(key)

    input_dim, hidden_dim, output_dim, num_layers = 32, 64, 16, 3
    x = jax.random.normal(xkey, (2, 8, input_dim), dtype=jnp.float32)

    def reference(params, x):
        y = x.reshape(-1, input_dim)
        for i, (w, b) in enumerate(params):
            y = y @ w + b
            if i < num_layers - 1:
                y = jnp.maximum(y, 0.0)
        return y.reshape(x.shape[:-1] + (output_dim,))

    # f32 compute path: should match the plain-JAX reference tightly.
    mlp_f32 = MLP(input_dim, hidden_dim, output_dim, num_layers, pkey,
                  compute_dtype=jnp.float32)
    out_f32 = jax.block_until_ready(mlp_f32(x))
    ref = reference(mlp_f32.params, x)
    assert out_f32.shape == (2, 8, output_dim)
    assert jnp.allclose(out_f32, ref, atol=1e-4, rtol=1e-4), (
        float(jnp.max(jnp.abs(out_f32 - ref))))

    # bf16 compute path (default, per perf review): looser tolerance vs the
    # f32 reference since weights/activations are stored in bf16.
    mlp_bf16 = MLP(input_dim, hidden_dim, output_dim, num_layers, pkey)
    out_bf16 = jax.block_until_ready(mlp_bf16(x))
    assert out_bf16.shape == (2, 8, output_dim)
    assert jnp.allclose(out_bf16, ref, atol=3e-2, rtol=3e-2), (
        float(jnp.max(jnp.abs(out_bf16 - ref))))

    print("KERNEL_OK")
</pallas_src>

<mosaic_0001>
module attributes {stable_mosaic.version = 11 : i64} {
  func.func @_fused_mlp_kernel(%arg0: i32, %arg1: memref<16x32xf32, #tpu.memory_space<vmem>>, %arg2: memref<32x128xf32, #tpu.memory_space<vmem>>, %arg3: memref<1x128xf32, #tpu.memory_space<vmem>>, %arg4: memref<128x128xf32, #tpu.memory_space<vmem>>, %arg5: memref<1x128xf32, #tpu.memory_space<vmem>>, %arg6: memref<128x128xf32, #tpu.memory_space<vmem>>, %arg7: memref<1x128xf32, #tpu.memory_space<vmem>>, %arg8: memref<16x128xf32, #tpu.memory_space<vmem>>) attributes {dimension_semantics = [#tpu.dimension_semantics<parallel>], iteration_bounds = array<i64: 1>, scalar_prefetch = 0 : i64, scratch_operands = 0 : i64, tpu.core_type = #tpu.core_type<tc>, window_params = [{transform_indices = @transform_0, window_bounds = array<i64: 16, 32>}, {pipeline_mode = #tpu.pipeline_mode<synchronous>, transform_indices = @transform_1, window_bounds = array<i64: 32, 128>}, {pipeline_mode = #tpu.pipeline_mode<synchronous>, transform_indices = @transform_2, window_bounds = array<i64: 1, 128>}, {pipeline_mode = #tpu.pipeline_mode<synchronous>, transform_indices = @transform_3, window_bounds = array<i64: 128, 128>}, {pipeline_mode = #tpu.pipeline_mode<synchronous>, transform_indices = @transform_4, window_bounds = array<i64: 1, 128>}, {pipeline_mode = #tpu.pipeline_mode<synchronous>, transform_indices = @transform_5, window_bounds = array<i64: 128, 128>}, {pipeline_mode = #tpu.pipeline_mode<synchronous>, transform_indices = @transform_6, window_bounds = array<i64: 1, 128>}, {transform_indices = @transform_7, window_bounds = array<i64: 16, 128>}]} {
    %c0 = arith.constant 0 : index
    %c0_0 = arith.constant 0 : index
    %0 = vector.load %arg1[%c0, %c0_0] : memref<16x32xf32, #tpu.memory_space<vmem>>, vector<16x32xf32>
    %c0_1 = arith.constant 0 : index
    %c0_2 = arith.constant 0 : index
    %1 = vector.load %arg2[%c0_1, %c0_2] : memref<32x128xf32, #tpu.memory_space<vmem>>, vector<32x128xf32>
    %c0_3 = arith.constant 0 : index
    %c0_4 = arith.constant 0 : index
    %2 = vector.load %arg3[%c0_3, %c0_4] : memref<1x128xf32, #tpu.memory_space<vmem>>, vector<1x128xf32>
    %cst = arith.constant dense<0.000000e+00> : vector<16x128xf32>
    %3 = tpu.matmul %0, %1, %cst {dimension_numbers = #tpu.dot_dimension_numbers<[1], [0], [0], [1], [0, 0, 1, 1], [], []>} : vector<16x32xf32>, vector<32x128xf32>, vector<16x128xf32> -> vector<16x128xf32>
    %4 = vector.broadcast %2 : vector<1x128xf32> to vector<16x128xf32>
    %5 = arith.addf %3, %4 : vector<16x128xf32>
    %cst_5 = arith.constant 0.000000e+00 : f32
    %6 = vector.broadcast %cst_5 : f32 to vector<16x128xf32>
    %7 = arith.maximumf %5, %6 : vector<16x128xf32>
    %c0_6 = arith.constant 0 : index
    %c0_7 = arith.constant 0 : index
    %8 = vector.load %arg4[%c0_6, %c0_7] : memref<128x128xf32, #tpu.memory_space<vmem>>, vector<128x128xf32>
    %c0_8 = arith.constant 0 : index
    %c0_9 = arith.constant 0 : index
    %9 = vector.load %arg5[%c0_8, %c0_9] : memref<1x128xf32, #tpu.memory_space<vmem>>, vector<1x128xf32>
    %cst_10 = arith.constant dense<0.000000e+00> : vector<16x128xf32>
    %10 = tpu.matmul %7, %8, %cst_10 {dimension_numbers = #tpu.dot_dimension_numbers<[1], [0], [0], [1], [0, 0, 1, 1], [], []>} : vector<16x128xf32>, vector<128x128xf32>, vector<16x128xf32> -> vector<16x128xf32>
    %11 = vector.broadcast %9 : vector<1x128xf32> to vector<16x128xf32>
    %12 = arith.addf %10, %11 : vector<16x128xf32>
    %cst_11 = arith.constant 0.000000e+00 : f32
    %13 = vector.broadcast %cst_11 : f32 to vector<16x128xf32>
    %14 = arith.maximumf %12, %13 : vector<16x128xf32>
    %c0_12 = arith.constant 0 : index
    %c0_13 = arith.constant 0 : index
    %15 = vector.load %arg6[%c0_12, %c0_13] : memref<128x128xf32, #tpu.memory_space<vmem>>, vector<128x128xf32>
    %c0_14 = arith.constant 0 : index
    %c0_15 = arith.constant 0 : index
    %16 = vector.load %arg7[%c0_14, %c0_15] : memref<1x128xf32, #tpu.memory_space<vmem>>, vector<1x128xf32>
    %cst_16 = arith.constant dense<0.000000e+00> : vector<16x128xf32>
    %17 = tpu.matmul %14, %15, %cst_16 {dimension_numbers = #tpu.dot_dimension_numbers<[1], [0], [0], [1], [0, 0, 1, 1], [], []>} : vector<16x128xf32>, vector<128x128xf32>, vector<16x128xf32> -> vector<16x128xf32>
    %18 = vector.broadcast %16 : vector<1x128xf32> to vector<16x128xf32>
    %19 = arith.addf %17, %18 : vector<16x128xf32>
    %c0_17 = arith.constant 0 : index
    %c0_18 = arith.constant 0 : index
    %20 = vector.load %arg8[%c0_17, %c0_18] : memref<16x128xf32, #tpu.memory_space<vmem>>, vector<16x128xf32>
    tpu.vector_store %arg8[%c0_17, %c0_18], %19 {strides = array<i32>} : memref<16x128xf32, #tpu.memory_space<vmem>>, vector<16x128xf32>,
    return
  }
  func.func @transform_0(%arg0: i32) -> (i32, i32) {
    %c0_i32 = arith.constant 0 : i32
    %c0_i32_0 = arith.constant 0 : i32
    return %arg0, %c0_i32 : i32, i32
  }
  func.func @transform_1(%arg0: i32) -> (i32, i32) {
    %c0_i32 = arith.constant 0 : i32
    %c0_i32_0 = arith.constant 0 : i32
    %c0_i32_1 = arith.constant 0 : i32
    return %c0_i32, %c0_i32_0 : i32, i32
  }
  func.func @transform_2(%arg0: i32) -> (i32, i32) {
    %c0_i32 = arith.constant 0 : i32
    %c0_i32_0 = arith.constant 0 : i32
    %c0_i32_1 = arith.constant 0 : i32
    return %c0_i32, %c0_i32_0 : i32, i32
  }
  func.func @transform_3(%arg0: i32) -> (i32, i32) {
    %c0_i32 = arith.constant 0 : i32
    %c0_i32_0 = arith.constant 0 : i32
    %c0_i32_1 = arith.constant 0 : i32
    return %c0_i32, %c0_i32_0 : i32, i32
  }
  func.func @transform_4(%arg0: i32) -> (i32, i32) {
    %c0_i32 = arith.constant 0 : i32
    %c0_i32_0 = arith.constant 0 : i32
    %c0_i32_1 = arith.constant 0 : i32
    return %c0_i32, %c0_i32_0 : i32, i32
  }
  func.func @transform_5(%arg0: i32) -> (i32, i32) {
    %c0_i32 = arith.constant 0 : i32
    %c0_i32_0 = arith.constant 0 : i32
    %c0_i32_1 = arith.constant 0 : i32
    return %c0_i32, %c0_i32_0 : i32, i32
  }
  func.func @transform_6(%arg0: i32) -> (i32, i32) {
    %c0_i32 = arith.constant 0 : i32
    %c0_i32_0 = arith.constant 0 : i32
    %c0_i32_1 = arith.constant 0 : i32
    return %c0_i32, %c0_i32_0 : i32, i32
  }
  func.func @transform_7(%arg0: i32) -> (i32, i32) {
    %c0_i32 = arith.constant 0 : i32
    %c0_i32_0 = arith.constant 0 : i32
    return %arg0, %c0_i32 : i32, i32
  }
}

module attributes {stable_mosaic.version = 11 : i64} {
  func.func @_fused_mlp_kernel(%arg0: i32, %arg1: memref<16x32xf32, #tpu.memory_space<vmem>>, %arg2: memref<32x128xf32, #tpu.memory_space<vmem>>, %arg3: memref<1x128xf32, #tpu.memory_space<vmem>>, %arg4: memref<128x128xf32, #tpu.memory_space<vmem>>, %arg5: memref<1x128xf32, #tpu.memory_space<vmem>>, %arg6: memref<128x128xf32, #tpu.memory_space<vmem>>, %arg7: memref<1x128xf32, #tpu.memory_space<vmem>>, %arg8: memref<16x128xf32, #tpu.memory_space<vmem>>) attributes {dimension_semantics = [#tpu.dimension_semantics<parallel>], iteration_bounds = array<i64: 1>, scalar_prefetch = 0 : i64, scratch_operands = 0 : i64, tpu.core_type = #tpu.core_type<tc>, window_params = [{transform_indices = @transform_0, window_bounds = array<i64: 16, 32>}, {pipeline_mode = #tpu.pipeline_mode<synchronous>, transform_indices = @transform_1, window_bounds = array<i64: 32, 128>}, {pipeline_mode = #tpu.pipeline_mode<synchronous>, transform_indices = @transform_2, window_bounds = array<i64: 1, 128>}, {pipeline_mode = #tpu.pipeline_mode<synchronous>, transform_indices = @transform_3, window_bounds = array<i64: 128, 128>}, {pipeline_mode = #tpu.pipeline_mode<synchronous>, transform_indices = @transform_4, window_bounds = array<i64: 1, 128>}, {pipeline_mode = #tpu.pipeline_mode<synchronous>, transform_indices = @transform_5, window_bounds = array<i64: 128, 128>}, {pipeline_mode = #tpu.pipeline_mode<synchronous>, transform_indices = @transform_6, window_bounds = array<i64: 1, 128>}, {transform_indices = @transform_7, window_bounds = array<i64: 16, 128>}]} {
    %c0 = arith.constant 0 : index
    %c0_0 = arith.constant 0 : index
    %0 = vector.load %arg1[%c0, %c0_0] : memref<16x32xf32, #tpu.memory_space<vmem>>, vector<16x32xf32>
    %c0_1 = arith.constant 0 : index
    %c0_2 = arith.constant 0 : index
    %1 = vector.load %arg2[%c0_1, %c0_2] : memref<32x128xf32, #tpu.memory_space<vmem>>, vector<32x128xf32>
    %c0_3 = arith.constant 0 : index
    %c0_4 = arith.constant 0 : index
    %2 = vector.load %arg3[%c0_3, %c0_4] : memref<1x128xf32, #tpu.memory_space<vmem>>, vector<1x128xf32>
    %cst = arith.constant dense<0.000000e+00> : vector<16x128xf32>
    %3 = tpu.matmul %0, %1, %cst {dimension_numbers = #tpu.dot_dimension_numbers<[1], [0], [0], [1], [0, 0, 1, 1], [], []>} : vector<16x32xf32>, vector<32x128xf32>, vector<16x128xf32> -> vector<16x128xf32>
    %4 = vector.broadcast %2 : vector<1x128xf32> to vector<16x128xf32>
    %5 = arith.addf %3, %4 : vector<16x128xf32>
    %cst_5 = arith.constant 0.000000e+00 : f32
    %6 = vector.broadcast %cst_5 : f32 to vector<16x128xf32>
    %7 = arith.maximumf %5, %6 : vector<16x128xf32>
    %c0_6 = arith.constant 0 : index
    %c0_7 = arith.constant 0 : index
    %8 = vector.load %arg4[%c0_6, %c0_7] : memref<128x128xf32, #tpu.memory_space<vmem>>, vector<128x128xf32>
    %c0_8 = arith.constant 0 : index
    %c0_9 = arith.constant 0 : index
    %9 = vector.load %arg5[%c0_8, %c0_9] : memref<1x128xf32, #tpu.memory_space<vmem>>, vector<1x128xf32>
    %cst_10 = arith.constant dense<0.000000e+00> : vector<16x128xf32>
    %10 = tpu.matmul %7, %8, %cst_10 {dimension_numbers = #tpu.dot_dimension_numbers<[1], [0], [0], [1], [0, 0, 1, 1], [], []>} : vector<16x128xf32>, vector<128x128xf32>, vector<16x128xf32> -> vector<16x128xf32>
    %11 = vector.broadcast %9 : vector<1x128xf32> to vector<16x128xf32>
    %12 = arith.addf %10, %11 : vector<16x128xf32>
    %cst_11 = arith.constant 0.000000e+00 : f32
    %13 = vector.broadcast %cst_11 : f32 to vector<16x128xf32>
    %14 = arith.maximumf %12, %13 : vector<16x128xf32>
    %c0_12 = arith.constant 0 : index
    %c0_13 = arith.constant 0 : index
    %15 = vector.load %arg6[%c0_12, %c0_13] : memref<128x128xf32, #tpu.memory_space<vmem>>, vector<128x128xf32>
    %c0_14 = arith.constant 0 : index
    %c0_15 = arith.constant 0 : index
    %16 = vector.load %arg7[%c0_14, %c0_15] : memref<1x128xf32, #tpu.memory_space<vmem>>, vector<1x128xf32>
    %cst_16 = arith.constant dense<0.000000e+00> : vector<16x128xf32>
    %17 = tpu.matmul %14, %15, %cst_16 {dimension_numbers = #tpu.dot_dimension_numbers<[1], [0], [0], [1], [0, 0, 1, 1], [], []>} : vector<16x128xf32>, vector<128x128xf32>, vector<16x128xf32> -> vector<16x128xf32>
    %18 = vector.broadcast %16 : vector<1x128xf32> to vector<16x128xf32>
    %19 = arith.addf %17, %18 : vector<16x128xf32>
    %c0_17 = arith.constant 0 : index
    %c0_18 = arith.constant 0 : index
    %20 = vector.load %arg8[%c0_17, %c0_18] : memref<16x128xf32, #tpu.memory_space<vmem>>, vector<16x128xf32>
    tpu.vector_store %arg8[%c0_17, %c0_18], %19 {strides = array<i32>} : memref<16x128xf32, #tpu.memory_space<vmem>>, vector<16x128xf32>,
    return
  }
  func.func @transform_0(%arg0: i32) -> (i32, i32) {
    %c0_i32 = arith.constant 0 : i32
    %c0_i32_0 = arith.constant 0 : i32
    return %arg0, %c0_i32 : i32, i32
  }
  func.func @transform_1(%arg0: i32) -> (i32, i32) {
    %c0_i32 = arith.constant 0 : i32
    %c0_i32_0 = arith.constant 0 : i32
    %c0_i32_1 = arith.constant 0 : i32
    return %c0_i32, %c0_i32_0 : i32, i32
  }
  func.func @transform_2(%arg0: i32) -> (i32, i32) {
    %c0_i32 = arith.constant 0 : i32
    %c0_i32_0 = arith.constant 0 : i32
    %c0_i32_1 = arith.constant 0 : i32
    return %c0_i32, %c0_i32_0 : i32, i32
  }
  func.func @transform_3(%arg0: i32) -> (i32, i32) {
    %c0_i32 = arith.constant 0 : i32
    %c0_i32_0 = arith.constant 0 : i32
    %c0_i32_1 = arith.constant 0 : i32
    return %c0_i32, %c0_i32_0 : i32, i32
  }
  func.func @transform_4(%arg0: i32) -> (i32, i32) {
    %c0_i32 = arith.constant 0 : i32
    %c0_i32_0 = arith.constant 0 : i32
    %c0_i32_1 = arith.constant 0 : i32
    return %c0_i32, %c0_i32_0 : i32, i32
  }
  func.func @transform_5(%arg0: i32) -> (i32, i32) {
    %c0_i32 = arith.constant 0 : i32
    %c0_i32_0 = arith.constant 0 : i32
    %c0_i32_1 = arith.constant 0 : i32
    return %c0_i32, %c0_i32_0 : i32, i32
  }
  func.func @transform_6(%arg0: i32) -> (i32, i32) {
    %c0_i32 = arith.constant 0 : i32
    %c0_i32_0 = arith.constant 0 : i32
    %c0_i32_1 = arith.constant 0 : i32
    return %c0_i32, %c0_i32_0 : i32, i32
  }
  func.func @transform_7(%arg0: i32) -> (i32, i32) {
    %c0_i32 = arith.constant 0 : i32
    %c0_i32_0 = arith.constant 0 : i32
    return %arg0, %c0_i32 : i32, i32
  }
}

</mosaic_0001>

<llo_original>
// kernel: _mlp_forward.1
$region0: #{_mlp_forward.1}
  #allocation0 [shape = 'u32[]', space=smem, size = 0x4, offset = 0x4, fixed_abs, tag = 'smem constant byte address 0x4 - core index']
  #allocation1 [shape = 'u32[144,128]{1,0:T(1,128)}', space=vmem, size = 0x12000, scoped, tag = 'internal scratch']
  %s0 = inlined_call_operand.hbm [shape: f32[16,32], index: 0, kind: input, shape index: {}]
  %s1 = inlined_call_operand.hbm [shape: f32[32,128], index: 1, kind: input, shape index: {}]
  %s2 = inlined_call_operand.vmem [shape: f32[1,128], index: 2, kind: input, shape index: {}]
  %s3 = inlined_call_operand.hbm [shape: f32[128,128], index: 3, kind: input, shape index: {}]
  %s4 = inlined_call_operand.vmem [shape: f32[1,128], index: 4, kind: input, shape index: {}]
  %s5 = inlined_call_operand.hbm [shape: f32[128,128], index: 5, kind: input, shape index: {}]
  %s6 = inlined_call_operand.vmem [shape: f32[1,128], index: 6, kind: input, shape index: {}]
  %s7 = inlined_call_operand.vmem [shape: f32[16,128], index: 7, kind: output, shape index: {}]
  %s8 = sld [smem:[#allocation0]]
  $region54: #{_mlp_forward.1} parent=0
    _
  %s10 = ssub.s32 1, %s8
  %s11 = scalar_select 0, %s10, %s8
  $region1: #{_mlp_forward.1} parent=0
    #allocation2 [shape = 'u8[8192]{0}', space=vmem, size = 0x2000, scoped, tag = 'input window, operand 0, single buffered']
    #allocation3 [shape = 's32[1]{0}', space=sflag, size = 0x4, scoped, tag = 'scoped memory for _mlp_forward.1']
    #allocation4 [shape = 'u8[16384]{0}', space=vmem, size = 0x4000, scoped, tag = 'input window, operand 1, single buffered']
    #allocation5 [shape = 's32[1]{0}', space=sflag, size = 0x4, scoped, tag = 'scoped memory for _mlp_forward.1']
    #allocation6 [shape = 'u8[65536]{0}', space=vmem, size = 0x10000, scoped, tag = 'input window, operand 3, single buffered']
    #allocation7 [shape = 'u8[65536]{0}', space=vmem, size = 0x10000, scoped, tag = 'input window, operand 5, single buffered']
    #allocation8 [shape = 's32[1]{0}', space=sflag, size = 0x4, scoped, tag = 'scoped memory for _mlp_forward.1']
    %12 = vsyncpa [#allocation3], 0
    %13 = vsyncpa [#allocation5], 0
    %14 = vsyncpa [#allocation8], 0
    // Predicated region
    $region2: #{_mlp_forward.1} parent=1 // pred_check
      _
    $region3: #{_mlp_forward.1} parent=1 // pred_check_branch
      %16 = sbr.rel (0) target = $region5
    $region4: #{_mlp_forward.1} parent=1 // pred_region
      %s18 = ssub.s32 256, 256
      %19 = vsyncadd [#allocation3], %s18
      %s20 = sshll.u32 [#allocation2], 4
      %s21 = int_to_ptr.vmem [resolvable:$true] %s20
      %26 = dma.hbm_to_vmem [thread:$0]  %s0, 256, %s21, [#allocation3], 128, 128, 8
    $region5: #{_mlp_forward.1} parent=1 // pred_fallthru
      _
    // Predicated region
    $region6: #{_mlp_forward.1} parent=1 // pred_check
      _
    $region7: #{_mlp_forward.1} parent=1 // pred_check_branch
      %28 = sbr.rel (0) target = $region9
    $region8: #{_mlp_forward.1} parent=1 // pred_region
      %s30 = ssub.s32 512, 512
      %31 = vsyncadd [#allocation5], %s30
      %s32 = sshll.u32 [#allocation4], 4
      %s33 = int_to_ptr.vmem [resolvable:$true] %s32
      %38 = dma.hbm_to_vmem [thread:$0]  %s1, 512, %s33, [#allocation5], 128, 128, 8
    $region9: #{_mlp_forward.1} parent=1 // pred_fallthru
      _
    // Predicated region
    $region10: #{_mlp_forward.1} parent=1 // pred_check
      _
    $region11: #{_mlp_forward.1} parent=1 // pred_check_branch
      %40 = sbr.rel (0) target = $region13
    $region12: #{_mlp_forward.1} parent=1 // pred_region
      _
    $region13: #{_mlp_forward.1} parent=1 // pred_fallthru
      _
    // Predicated region
    $region14: #{_mlp_forward.1} parent=1 // pred_check
      _
    $region15: #{_mlp_forward.1} parent=1 // pred_check_branch
      %42 = sbr.rel (0) target = $region17
    $region16: #{_mlp_forward.1} parent=1 // pred_region
      %s44 = ssub.s32 2048, 2048
      %45 = vsyncadd [#allocation5], %s44
      %s46 = sshll.u32 [#allocation6], 4
      %s47 = int_to_ptr.vmem [resolvable:$true] %s46
      %52 = dma.hbm_to_vmem [thread:$0]  %s3, 2048, %s47, [#allocation5], 128, 128, 8
    $region17: #{_mlp_forward.1} parent=1 // pred_fallthru
      _
    // Predicated region
    $region18: #{_mlp_forward.1} parent=1 // pred_check
      _
    $region19: #{_mlp_forward.1} parent=1 // pred_check_branch
      %54 = sbr.rel (0) target = $region21
    $region20: #{_mlp_forward.1} parent=1 // pred_region
      _
    $region21: #{_mlp_forward.1} parent=1 // pred_fallthru
      _
    // Predicated region
    $region22: #{_mlp_forward.1} parent=1 // pred_check
      _
    $region23: #{_mlp_forward.1} parent=1 // pred_check_branch
      %56 = sbr.rel (0) target = $region25
    $region24: #{_mlp_forward.1} parent=1 // pred_region
      %s58 = ssub.s32 2048, 2048
      %59 = vsyncadd [#allocation8], %s58
      %s60 = sshll.u32 [#allocation7], 4
      %s61 = int_to_ptr.vmem [resolvable:$true] %s60
      %66 = dma.hbm_to_vmem [thread:$0]  %s5, 2048, %s61, [#allocation8], 128, 128, 8
    $region25: #{_mlp_forward.1} parent=1 // pred_fallthru
      _
    // Predicated region
    $region26: #{_mlp_forward.1} parent=1 // pred_check
      _
    $region27: #{_mlp_forward.1} parent=1 // pred_check_branch
      %68 = sbr.rel (0) target = $region29
    $region28: #{_mlp_forward.1} parent=1 // pred_region
      _
    $region29: #{_mlp_forward.1} parent=1 // pred_fallthru
      _
    // Predicated region
    $region30: #{_mlp_forward.1} parent=1 // pred_check
      _
    $region31: #{_mlp_forward.1} parent=1 // pred_check_branch
      %70 = sbr.rel (0) target = $region33
    $region32: #{_mlp_forward.1} parent=1 // pred_region
      %71 = dma.done [#allocation3], 256
    $region33: #{_mlp_forward.1} parent=1 // pred_fallthru
      _
    // Predicated region
    $region34: #{_mlp_forward.1} parent=1 // pred_check
      _
    $region35: #{_mlp_forward.1} parent=1 // pred_check_branch
      %73 = sbr.rel (0) target = $region37
    $region36: #{_mlp_forward.1} parent=1 // pred_region
      %74 = dma.done [#allocation5], 512
    $region37: #{_mlp_forward.1} parent=1 // pred_fallthru
      _
    // Predicated region
    $region38: #{_mlp_forward.1} parent=1 // pred_check
      _
    $region39: #{_mlp_forward.1} parent=1 // pred_check_branch
      %76 = sbr.rel (0) target = $region41
    $region40: #{_mlp_forward.1} parent=1 // pred_region
      %77 = dma.done [#allocation5], 2048
    $region41: #{_mlp_forward.1} parent=1 // pred_fallthru
      _
    // Predicated region
    $region42: #{_mlp_forward.1} parent=1 // pred_check
      _
    $region43: #{_mlp_forward.1} parent=1 // pred_check_branch
      %79 = sbr.rel (0) target = $region45
    $region44: #{_mlp_forward.1} parent=1 // pred_region
      %80 = dma.done [#allocation8], 2048
    $region45: #{_mlp_forward.1} parent=1 // pred_fallthru
      _
    %v81 = vld [vmem:[#allocation2] sm:$0xff]
    %v82 = vld [vmem:[#allocation2 + $0x8] sm:$0xff]
    %v83 = vld [vmem:[#allocation4] sm:$0xff]
    %v84 = vld [vmem:[#allocation4 + $0x8] sm:$0xff]
    %v85 = vld [vmem:[#allocation4 + $0x10] sm:$0xff]
    %v86 = vld [vmem:[#allocation4 + $0x18] sm:$0xff]
    %v87 = vld [vmem:[%s2] sm:$0x1]
    %v89 = vlaneseq
    %v90 = vshrl.u32 %v89, 7
    %v91 = vsub.s32 0, %v90
    %v92 = vrot.slane %v87, %v91
    %vm94 = vcmask 261120
    %v96 = vsel %vm94, %v81, 0
    %v99 = vsel %vm94, %v82, 0
    %101 = vmatprep.subr.mxu0 0.0
    %102 = vmatpush1.msra.mxu0 %v83
    %103 = vmatprep.subr.mxu0 0.0
    %104 = vmatpush1.msra.mxu0 %v84
    %105 = vmatprep.subr.mxu0 0.0
    %106 = vmatpush1.msra.mxu0 %v85
    %107 = vmatprep.subr.mxu0 0.0
    %108 = vmatpush1.msra.mxu0 %v86
    %109 = vmatprep.subr.mxu0 0.0
    %110 = vmatpush1.msra.mxu0 0.0
    %111 = vmatprep.subr.mxu0 0.0
    %112 = vmatpush1.msra.mxu0 0.0
    %113 = vmatprep.subr.mxu0 0.0
    %114 = vmatpush1.msra.mxu0 0.0
    %115 = vmatprep.subr.mxu0 0.0
    %116 = vmatpush1.msra.mxu0 0.0
    %117 = vmatprep.subr.mxu0 0.0
    %118 = vmatpush1.msra.mxu0 0.0
    %119 = vmatprep.subr.mxu0 0.0
    %120 = vmatpush1.msra.mxu0 0.0
    %121 = vmatprep.subr.mxu0 0.0
    %122 = vmatpush1.msra.mxu0 0.0
    %123 = vmatprep.subr.mxu0 0.0
    %124 = vmatpush1.msra.mxu0 0.0
    %125 = vmatprep.subr.mxu0 0.0
    %126 = vmatpush1.msra.mxu0 0.0
    %127 = vmatprep.subr.mxu0 0.0
    %128 = vmatpush1.msra.mxu0 0.0
    %129 = vmatprep.subr.mxu0 0.0
    %130 = vmatpush1.msra.mxu0 0.0
    %131 = vmatprep.subr.mxu0 0.0
    %132 = vmatpush1.msra.mxu0 0.0
    %133 = vmatprep.subr.mxu0 0.0
    %134 = vmatpush1.msra.mxu0 0.0
    %135 = vmatprep.subr.mxu0 0.0
    %136 = vmatpush1.msra.mxu0 0.0
    %137 = vmatprep.subr.mxu0 0.0
    %138 = vmatpush1.msra.mxu0 0.0
    %139 = vmatprep.subr.mxu0 0.0
    %140 = vmatpush1.msra.mxu0 0.0
    %141 = vmatprep.subr.mxu0 0.0
    %142 = vmatpush1.msra.mxu0 0.0
    %143 = vmatprep.subr.mxu0 0.0
    %144 = vmatpush1.msra.mxu0 0.0
    %145 = vmatprep.subr.mxu0 0.0
    %146 = vmatpush1.msra.mxu0 0.0
    %147 = vmatprep.subr.mxu0 0.0
    %148 = vmatpush1.msra.mxu0 0.0
    %149 = vmatprep.subr.mxu0 0.0
    %150 = vmatpush1.msra.mxu0 0.0
    %151 = vmatprep.subr.mxu0 0.0
    %152 = vmatpush1.msra.mxu0 0.0
    %153 = vmatprep.subr.mxu0 0.0
    %154 = vmatpush1.msra.mxu0 0.0
    %155 = vmatprep.subr.mxu0 0.0
    %156 = vmatpush1.msra.mxu0 0.0
    %157 = vmatprep.subr.mxu0 0.0
    %158 = vmatpush1.msra.mxu0 0.0
    %159 = vmatprep.subr.mxu0 0.0
    %160 = vmatpush1.msra.mxu0 0.0
    %161 = vmatprep.subr.mxu0 0.0
    %162 = vmatpush1.msra.mxu0 0.0
    %163 = vmatprep.subr.mxu0 0.0
    %164 = vmatpush1.msra.mxu0 0.0
    %165 = vmatprep.mubr.f32.mxu0 0.0
    %166 = vmatmul.mubr.f32.gmra.mrb[0].mxu0 %v96
    %v167 = vpop.f32.mrb[0].mxu0
    %v168 = vadd.f32 %v92, %v167
    %v169 = vpop.f32.mrb[0].mxu0
    %170 = vmatprep.mubr.f32.mxu0 0.0
    %171 = vmatmul.mubr.f32.gmra.mrb[0].mxu0 %v99
    %v172 = vpop.f32.mrb[0].mxu0
    %v173 = vadd.f32 %v92, %v172
    %v174 = vpop.f32.mrb[0].mxu0
    %175 = vdwg.mxu0
    %v176 = vmax.f32 %v168, 0.0
    %v177 = vmax.f32 %v173, 0.0
    %v178 = vld [vmem:[#allocation6] sm:$0xff]
    %v179 = vld [vmem:[#allocation6 + $0x8] sm:$0xff]
    %v180 = vld [vmem:[#allocation6 + $0x10] sm:$0xff]
    %v181 = vld [vmem:[#allocation6 + $0x18] sm:$0xff]
    %v182 = vld [vmem:[#allocation6 + $0x20] sm:$0xff]
    %v183 = vld [vmem:[#allocation6 + $0x28] sm:$0xff]
    %v184 = vld [vmem:[#allocation6 + $0x30] sm:$0xff]
    %v185 = vld [vmem:[#allocation6 + $0x38] sm:$0xff]
    %v186 = vld [vmem:[#allocation6 + $0x40] sm:$0xff]
    %v187 = vld [vmem:[#allocation6 + $0x48] sm:$0xff]
    %v188 = vld [vmem:[#allocation6 + $0x50] sm:$0xff]
    %v189 = vld [vmem:[#allocation6 + $0x58] sm:$0xff]
    %v190 = vld [vmem:[#allocation6 + $0x60] sm:$0xff]
    %v191 = vld [vmem:[#allocation6 + $0x68] sm:$0xff]
    %v192 = vld [vmem:[#allocation6 + $0x70] sm:$0xff]
    %v193 = vld [vmem:[#allocation6 + $0x78] sm:$0xff]
    %v194 = vld [vmem:[%s4] sm:$0x1]
    %v196 = vlaneseq
    %v197 = vshrl.u32 %v196, 7
    %v198 = vsub.s32 0, %v197
    %v199 = vrot.slane %v194, %v198
    %201 = vmatprep.subr.mxu0 0.0
    %202 = vmatpush1.msra.mxu0 %v178
    %203 = vmatprep.subr.mxu0 0.0
    %204 = vmatpush1.msra.mxu0 %v179
    %205 = vmatprep.subr.mxu0 0.0
    %206 = vmatpush1.msra.mxu0 %v180
    %207 = vmatprep.subr.mxu0 0.0
    %208 = vmatpush1.msra.mxu0 %v181
    %209 = vmatprep.subr.mxu0 0.0
    %210 = vmatpush1.msra.mxu0 %v182
    %211 = vmatprep.subr.mxu0 0.0
    %212 = vmatpush1.msra.mxu0 %v183
    %213 = vmatprep.subr.mxu0 0.0
    %214 = vmatpush1.msra.mxu0 %v184
    %215 = vmatprep.subr.mxu0 0.0
    %216 = vmatpush1.msra.mxu0 %v185
    %217 = vmatprep.subr.mxu0 0.0
    %218 = vmatpush1.msra.mxu0 %v186
    %219 = vmatprep.subr.mxu0 0.0
    %220 = vmatpush1.msra.mxu0 %v187
    %221 = vmatprep.subr.mxu0 0.0
    %222 = vmatpush1.msra.mxu0 %v188
    %223 = vmatprep.subr.mxu0 0.0
    %224 = vmatpush1.msra.mxu0 %v189
    %225 = vmatprep.subr.mxu0 0.0
    %226 = vmatpush1.msra.mxu0 %v190
    %227 = vmatprep.subr.mxu0 0.0
    %228 = vmatpush1.msra.mxu0 %v191
    %229 = vmatprep.subr.mxu0 0.0
    %230 = vmatpush1.msra.mxu0 %v192
    %231 = vmatprep.subr.mxu0 0.0
    %232 = vmatpush1.msra.mxu0 %v193
    %233 = vmatprep.subr.mxu0 0.0
    %234 = vmatpush1.msra.mxu0 0.0
    %235 = vmatprep.subr.mxu0 0.0
    %236 = vmatpush1.msra.mxu0 0.0
    %237 = vmatprep.subr.mxu0 0.0
    %238 = vmatpush1.msra.mxu0 0.0
    %239 = vmatprep.subr.mxu0 0.0
    %240 = vmatpush1.msra.mxu0 0.0
    %241 = vmatprep.subr.mxu0 0.0
    %242 = vmatpush1.msra.mxu0 0.0
    %243 = vmatprep.subr.mxu0 0.0
    %244 = vmatpush1.msra.mxu0 0.0
    %245 = vmatprep.subr.mxu0 0.0
    %246 = vmatpush1.msra.mxu0 0.0
    %247 = vmatprep.subr.mxu0 0.0
    %248 = vmatpush1.msra.mxu0 0.0
    %249 = vmatprep.subr.mxu0 0.0
    %250 = vmatpush1.msra.mxu0 0.0
    %251 = vmatprep.subr.mxu0 0.0
    %252 = vmatpush1.msra.mxu0 0.0
    %253 = vmatprep.subr.mxu0 0.0
    %254 = vmatpush1.msra.mxu0 0.0
    %255 = vmatprep.subr.mxu0 0.0
    %256 = vmatpush1.msra.mxu0 0.0
    %257 = vmatprep.subr.mxu0 0.0
    %258 = vmatpush1.msra.mxu0 0.0
    %259 = vmatprep.subr.mxu0 0.0
    %260 = vmatpush1.msra.mxu0 0.0
    %261 = vmatprep.subr.mxu0 0.0
    %262 = vmatpush1.msra.mxu0 0.0
    %263 = vmatprep.subr.mxu0 0.0
    %264 = vmatpush1.msra.mxu0 0.0
    %265 = vmatprep.mubr.f32.mxu0 0.0
    %266 = vmatmul.mubr.f32.gmra.mrb[0].mxu0 %v176
    %v267 = vpop.f32.mrb[0].mxu0
    %v268 = vadd.f32 %v199, %v267
    %v269 = vpop.f32.mrb[0].mxu0
    %270 = vmatprep.mubr.f32.mxu0 0.0
    %271 = vmatmul.mubr.f32.gmra.mrb[0].mxu0 %v177
    %v272 = vpop.f32.mrb[0].mxu0
    %v273 = vadd.f32 %v199, %v272
    %v274 = vpop.f32.mrb[0].mxu0
    %275 = vdwg.mxu0
    %v276 = vmax.f32 %v268, 0.0
    %v277 = vmax.f32 %v273, 0.0
    %v278 = vld [vmem:[#allocation7] sm:$0xff]
    %v279 = vld [vmem:[#allocation7 + $0x8] sm:$0xff]
    %v280 = vld [vmem:[#allocation7 + $0x10] sm:$0xff]
    %v281 = vld [vmem:[#allocation7 + $0x18] sm:$0xff]
    %v282 = vld [vmem:[#allocation7 + $0x20] sm:$0xff]
    %v283 = vld [vmem:[#allocation7 + $0x28] sm:$0xff]
    %v284 = vld [vmem:[#allocation7 + $0x30] sm:$0xff]
    %v285 = vld [vmem:[#allocation7 + $0x38] sm:$0xff]
    %v286 = vld [vmem:[#allocation7 + $0x40] sm:$0xff]
    %v287 = vld [vmem:[#allocation7 + $0x48] sm:$0xff]
    %v288 = vld [vmem:[#allocation7 + $0x50] sm:$0xff]
    %v289 = vld [vmem:[#allocation7 + $0x58] sm:$0xff]
    %v290 = vld [vmem:[#allocation7 + $0x60] sm:$0xff]
    %v291 = vld [vmem:[#allocation7 + $0x68] sm:$0xff]
    %v292 = vld [vmem:[#allocation7 + $0x70] sm:$0xff]
    %v293 = vld [vmem:[#allocation7 + $0x78] sm:$0xff]
    %v294 = vld [vmem:[%s6] sm:$0x1]
    %v296 = vlaneseq
    %v297 = vshrl.u32 %v296, 7
    %v298 = vsub.s32 0, %v297
    %v299 = vrot.slane %v294, %v298
    %301 = vmatprep.subr.mxu0 0.0
    %302 = vmatpush1.msra.mxu0 %v278
    %303 = vmatprep.subr.mxu0 0.0
    %304 = vmatpush1.msra.mxu0 %v279
    %305 = vmatprep.subr.mxu0 0.0
    %306 = vmatpush1.msra.mxu0 %v280
    %307 = vmatprep.subr.mxu0 0.0
    %308 = vmatpush1.msra.mxu0 %v281
    %309 = vmatprep.subr.mxu0 0.0
    %310 = vmatpush1.msra.mxu0 %v282
    %311 = vmatprep.subr.mxu0 0.0
    %312 = vmatpush1.msra.mxu0 %v283
    %313 = vmatprep.subr.mxu0 0.0
    %314 = vmatpush1.msra.mxu0 %v284
    %315 = vmatprep.subr.mxu0 0.0
    %316 = vmatpush1.msra.mxu0 %v285
    %317 = vmatprep.subr.mxu0 0.0
    %318 = vmatpush1.msra.mxu0 %v286
    %319 = vmatprep.subr.mxu0 0.0
    %320 = vmatpush1.msra.mxu0 %v287
    %321 = vmatprep.subr.mxu0 0.0
    %322 = vmatpush1.msra.mxu0 %v288
    %323 = vmatprep.subr.mxu0 0.0
    %324 = vmatpush1.msra.mxu0 %v289
    %325 = vmatprep.subr.mxu0 0.0
    %326 = vmatpush1.msra.mxu0 %v290
    %327 = vmatprep.subr.mxu0 0.0
    %328 = vmatpush1.msra.mxu0 %v291
    %329 = vmatprep.subr.mxu0 0.0
    %330 = vmatpush1.msra.mxu0 %v292
    %331 = vmatprep.subr.mxu0 0.0
    %332 = vmatpush1.msra.mxu0 %v293
    %333 = vmatprep.subr.mxu0 0.0
    %334 = vmatpush1.msra.mxu0 0.0
    %335 = vmatprep.subr.mxu0 0.0
    %336 = vmatpush1.msra.mxu0 0.0
    %337 = vmatprep.subr.mxu0 0.0
    %338 = vmatpush1.msra.mxu0 0.0
    %339 = vmatprep.subr.mxu0 0.0
    %340 = vmatpush1.msra.mxu0 0.0
    %341 = vmatprep.subr.mxu0 0.0
    %342 = vmatpush1.msra.mxu0 0.0
    %343 = vmatprep.subr.mxu0 0.0
    %344 = vmatpush1.msra.mxu0 0.0
    %345 = vmatprep.subr.mxu0 0.0
    %346 = vmatpush1.msra.mxu0 0.0
    %347 = vmatprep.subr.mxu0 0.0
    %348 = vmatpush1.msra.mxu0 0.0
    %349 = vmatprep.subr.mxu0 0.0
    %350 = vmatpush1.msra.mxu0 0.0
    %351 = vmatprep.subr.mxu0 0.0
    %352 = vmatpush1.msra.mxu0 0.0
    %353 = vmatprep.subr.mxu0 0.0
    %354 = vmatpush1.msra.mxu0 0.0
    %355 = vmatprep.subr.mxu0 0.0
    %356 = vmatpush1.msra.mxu0 0.0
    %357 = vmatprep.subr.mxu0 0.0
    %358 = vmatpush1.msra.mxu0 0.0
    %359 = vmatprep.subr.mxu0 0.0
    %360 = vmatpush1.msra.mxu0 0.0
    %361 = vmatprep.subr.mxu0 0.0
    %362 = vmatpush1.msra.mxu0 0.0
    %363 = vmatprep.subr.mxu0 0.0
    %364 = vmatpush1.msra.mxu0 0.0
    %365 = vmatprep.mubr.f32.mxu0 0.0
    %366 = vmatmul.mubr.f32.gmra.mrb[0].mxu0 %v276
    %v367 = vpop.f32.mrb[0].mxu0
    %v368 = vadd.f32 %v299, %v367
    %v369 = vpop.f32.mrb[0].mxu0
    %370 = vmatprep.mubr.f32.mxu0 0.0
    %371 = vmatmul.mubr.f32.gmra.mrb[0].mxu0 %v277
    %v372 = vpop.f32.mrb[0].mxu0
    %v373 = vadd.f32 %v299, %v372
    %v374 = vpop.f32.mrb[0].mxu0
    %375 = vdwg.mxu0
    %376 = vst [vmem:[%s7] sm:$0xff] %v368
    %377 = vst [vmem:[%s7 + $0x8] sm:$0xff] %v373
    // Predicated region
    $region46: #{_mlp_forward.1} parent=1 // pred_check
      _
    $region47: #{_mlp_forward.1} parent=1 // pred_check_branch
      %379 = sbr.rel (0) target = $region49
    $region48: #{_mlp_forward.1} parent=1 // pred_region
      _
    $region49: #{_mlp_forward.1} parent=1 // pred_fallthru
      _
    // Predicated region
    $region50: #{_mlp_forward.1} parent=1 // pred_check
      _
    $region51: #{_mlp_forward.1} parent=1 // pred_check_branch
      %381 = sbr.rel (0) target = $region53
    $region52: #{_mlp_forward.1} parent=1 // pred_region
      _
    $region53: #{_mlp_forward.1} parent=1 // pred_fallthru
      _
    %382 = vsyncpa [#allocation3], 1
    %383 = vsyncpa [#allocation5], 1
    %384 = vsyncpa [#allocation8], 1

// kernel: _mlp_forward.1
$region0: #{_mlp_forward.1}
  #allocation0 [shape = 'u32[]', space=smem, size = 0x4, offset = 0x4, fixed_abs, tag = 'smem constant byte address 0x4 - core index']
  #allocation1 [shape = 'u32[144,128]{1,0:T(1,128)}', space=vmem, size = 0x12000, scoped, tag = 'internal scratch']
  %s0 = inlined_call_operand.hbm [shape: f32[16,32], index: 0, kind: input, shape index: {}]
  %s1 = inlined_call_operand.hbm [shape: f32[32,128], index: 1, kind: input, shape index: {}]
  %s2 = inlined_call_operand.vmem [shape: f32[1,128], index: 2, kind: input, shape index: {}]
  %s3 = inlined_call_operand.hbm [shape: f32[128,128], index: 3, kind: input, shape index: {}]
  %s4 = inlined_call_operand.vmem [shape: f32[1,128], index: 4, kind: input, shape index: {}]
  %s5 = inlined_call_operand.hbm [shape: f32[128,128], index: 5, kind: input, shape index: {}]
  %s6 = inlined_call_operand.vmem [shape: f32[1,128], index: 6, kind: input, shape index: {}]
  %s7 = inlined_call_operand.vmem [shape: f32[16,128], index: 7, kind: output, shape index: {}]
  %s8 = sld [smem:[#allocation0]]
  $region54: #{_mlp_forward.1} parent=0
    _
  %s10 = ssub.s32 1, %s8
  %s11 = scalar_select 0, %s10, %s8
  $region1: #{_mlp_forward.1} parent=0
    #allocation2 [shape = 'u8[8192]{0}', space=vmem, size = 0x2000, scoped, tag = 'input window, operand 0, single buffered']
    #allocation3 [shape = 's32[1]{0}', space=sflag, size = 0x4, scoped, tag = 'scoped memory for _mlp_forward.1']
    #allocation4 [shape = 'u8[16384]{0}', space=vmem, size = 0x4000, scoped, tag = 'input window, operand 1, single buffered']
    #allocation5 [shape = 's32[1]{0}', space=sflag, size = 0x4, scoped, tag = 'scoped memory for _mlp_forward.1']
    #allocation6 [shape = 'u8[65536]{0}', space=vmem, size = 0x10000, scoped, tag = 'input window, operand 3, single buffered']
    #allocation7 [shape = 'u8[65536]{0}', space=vmem, size = 0x10000, scoped, tag = 'input window, operand 5, single buffered']
    #allocation8 [shape = 's32[1]{0}', space=sflag, size = 0x4, scoped, tag = 'scoped memory for _mlp_forward.1']
    %12 = vsyncpa [#allocation3], 0
    %13 = vsyncpa [#allocation5], 0
    %14 = vsyncpa [#allocation8], 0
    // Predicated region
    $region2: #{_mlp_forward.1} parent=1 // pred_check
      _
    $region3: #{_mlp_forward.1} parent=1 // pred_check_branch
      %16 = sbr.rel (0) target = $region5
    $region4: #{_mlp_forward.1} parent=1 // pred_region
      %s18 = ssub.s32 256, 256
      %19 = vsyncadd [#allocation3], %s18
      %s20 = sshll.u32 [#allocation2], 4
      %s21 = int_to_ptr.vmem [resolvable:$true] %s20
      %26 = dma.hbm_to_vmem [thread:$0]  %s0, 256, %s21, [#allocation3], 128, 128, 8
    $region5: #{_mlp_forward.1} parent=1 // pred_fallthru
      _
    // Predicated region
    $region6: #{_mlp_forward.1} parent=1 // pred_check
      _
    $region7: #{_mlp_forward.1} parent=1 // pred_check_branch
      %28 = sbr.rel (0) target = $region9
    $region8: #{_mlp_forward.1} parent=1 // pred_region
      %s30 = ssub.s32 512, 512
      %31 = vsyncadd [#allocation5], %s30
      %s32 = sshll.u32 [#allocation4], 4
      %s33 = int_to_ptr.vmem [resolvable:$true] %s32
      %38 = dma.hbm_to_vmem [thread:$0]  %s1, 512, %s33, [#allocation5], 128, 128, 8
    $region9: #{_mlp_forward.1} parent=1 // pred_fallthru
      _
    // Predicated region
    $region10: #{_mlp_forward.1} parent=1 // pred_check
      _
    $region11: #{_mlp_forward.1} parent=1 // pred_check_branch
      %40 = sbr.rel (0) target = $region13
    $region12: #{_mlp_forward.1} parent=1 // pred_region
      _
    $region13: #{_mlp_forward.1} parent=1 // pred_fallthru
      _
    // Predicated region
    $region14: #{_mlp_forward.1} parent=1 // pred_check
      _
    $region15: #{_mlp_forward.1} parent=1 // pred_check_branch
      %42 = sbr.rel (0) target = $region17
    $region16: #{_mlp_forward.1} parent=1 // pred_region
      %s44 = ssub.s32 2048, 2048
      %45 = vsyncadd [#allocation5], %s44
      %s46 = sshll.u32 [#allocation6], 4
      %s47 = int_to_ptr.vmem [resolvable:$true] %s46
      %52 = dma.hbm_to_vmem [thread:$0]  %s3, 2048, %s47, [#allocation5], 128, 128, 8
    $region17: #{_mlp_forward.1} parent=1 // pred_fallthru
      _
    // Predicated region
    $region18: #{_mlp_forward.1} parent=1 // pred_check
      _
    $region19: #{_mlp_forward.1} parent=1 // pred_check_branch
      %54 = sbr.rel (0) target = $region21
    $region20: #{_mlp_forward.1} parent=1 // pred_region
      _
    $region21: #{_mlp_forward.1} parent=1 // pred_fallthru
      _
    // Predicated region
    $region22: #{_mlp_forward.1} parent=1 // pred_check
      _
    $region23: #{_mlp_forward.1} parent=1 // pred_check_branch
      %56 = sbr.rel (0) target = $region25
    $region24: #{_mlp_forward.1} parent=1 // pred_region
      %s58 = ssub.s32 2048, 2048
      %59 = vsyncadd [#allocation8], %s58
      %s60 = sshll.u32 [#allocation7], 4
      %s61 = int_to_ptr.vmem [resolvable:$true] %s60
      %66 = dma.hbm_to_vmem [thread:$0]  %s5, 2048, %s61, [#allocation8], 128, 128, 8
    $region25: #{_mlp_forward.1} parent=1 // pred_fallthru
      _
    // Predicated region
    $region26: #{_mlp_forward.1} parent=1 // pred_check
      _
    $region27: #{_mlp_forward.1} parent=1 // pred_check_branch
      %68 = sbr.rel (0) target = $region29
    $region28: #{_mlp_forward.1} parent=1 // pred_region
      _
    $region29: #{_mlp_forward.1} parent=1 // pred_fallthru
      _
    // Predicated region
    $region30: #{_mlp_forward.1} parent=1 // pred_check
      _
    $region31: #{_mlp_forward.1} parent=1 // pred_check_branch
      %70 = sbr.rel (0) target = $region33
    $region32: #{_mlp_forward.1} parent=1 // pred_region
      %71 = dma.done [#allocation3], 256
    $region33: #{_mlp_forward.1} parent=1 // pred_fallthru
      _
    // Predicated region
    $region34: #{_mlp_forward.1} parent=1 // pred_check
      _
    $region35: #{_mlp_forward.1} parent=1 // pred_check_branch
      %73 = sbr.rel (0) target = $region37
    $region36: #{_mlp_forward.1} parent=1 // pred_region
      %74 = dma.done [#allocation5], 512
    $region37: #{_mlp_forward.1} parent=1 // pred_fallthru
      _
    // Predicated region
    $region38: #{_mlp_forward.1} parent=1 // pred_check
      _
    $region39: #{_mlp_forward.1} parent=1 // pred_check_branch
      %76 = sbr.rel (0) target = $region41
    $region40: #{_mlp_forward.1} parent=1 // pred_region
      %77 = dma.done [#allocation5], 2048
    $region41: #{_mlp_forward.1} parent=1 // pred_fallthru
      _
    // Predicated region
    $region42: #{_mlp_forward.1} parent=1 // pred_check
      _
    $region43: #{_mlp_forward.1} parent=1 // pred_check_branch
      %79 = sbr.rel (0) target = $region45
    $region44: #{_mlp_forward.1} parent=1 // pred_region
      %80 = dma.done [#allocation8], 2048
    $region45: #{_mlp_forward.1} parent=1 // pred_fallthru
      _
    %v81 = vld [vmem:[#allocation2] sm:$0xff]
    %v82 = vld [vmem:[#allocation2 + $0x8] sm:$0xff]
    %v83 = vld [vmem:[#allocation4] sm:$0xff]
    %v84 = vld [vmem:[#allocation4 + $0x8] sm:$0xff]
    %v85 = vld [vmem:[#allocation4 + $0x10] sm:$0xff]
    %v86 = vld [vmem:[#allocation4 + $0x18] sm:$0xff]
    %v87 = vld [vmem:[%s2] sm:$0x1]
    %v89 = vlaneseq
    %v90 = vshrl.u32 %v89, 7
    %v91 = vsub.s32 0, %v90
    %v92 = vrot.slane %v87, %v91
    %vm94 = vcmask 261120
    %v96 = vsel %vm94, %v81, 0
    %v99 = vsel %vm94, %v82, 0
    %101 = vmatprep.subr.mxu0 0.0
    %102 = vmatpush1.msra.mxu0 %v83
    %103 = vmatprep.subr.mxu0 0.0
    %104 = vmatpush1.msra.mxu0 %v84
    %105 = vmatprep.subr.mxu0 0.0
    %106 = vmatpush1.msra.mxu0 %v85
    %107 = vmatprep.subr.mxu0 0.0
    %108 = vmatpush1.msra.mxu0 %v86
    %109 = vmatprep.subr.mxu0 0.0
    %110 = vmatpush1.msra.mxu0 0.0
    %111 = vmatprep.subr.mxu0 0.0
    %112 = vmatpush1.msra.mxu0 0.0
    %113 = vmatprep.subr.mxu0 0.0
    %114 = vmatpush1.msra.mxu0 0.0
    %115 = vmatprep.subr.mxu0 0.0
    %116 = vmatpush1.msra.mxu0 0.0
    %117 = vmatprep.subr.mxu0 0.0
    %118 = vmatpush1.msra.mxu0 0.0
    %119 = vmatprep.subr.mxu0 0.0
    %120 = vmatpush1.msra.mxu0 0.0
    %121 = vmatprep.subr.mxu0 0.0
    %122 = vmatpush1.msra.mxu0 0.0
    %123 = vmatprep.subr.mxu0 0.0
    %124 = vmatpush1.msra.mxu0 0.0
    %125 = vmatprep.subr.mxu0 0.0
    %126 = vmatpush1.msra.mxu0 0.0
    %127 = vmatprep.subr.mxu0 0.0
    %128 = vmatpush1.msra.mxu0 0.0
    %129 = vmatprep.subr.mxu0 0.0
    %130 = vmatpush1.msra.mxu0 0.0
    %131 = vmatprep.subr.mxu0 0.0
    %132 = vmatpush1.msra.mxu0 0.0
    %133 = vmatprep.subr.mxu0 0.0
    %134 = vmatpush1.msra.mxu0 0.0
    %135 = vmatprep.subr.mxu0 0.0
    %136 = vmatpush1.msra.mxu0 0.0
    %137 = vmatprep.subr.mxu0 0.0
    %138 = vmatpush1.msra.mxu0 0.0
    %139 = vmatprep.subr.mxu0 0.0
    %140 = vmatpush1.msra.mxu0 0.0
    %141 = vmatprep.subr.mxu0 0.0
    %142 = vmatpush1.msra.mxu0 0.0
    %143 = vmatprep.subr.mxu0 0.0
    %144 = vmatpush1.msra.mxu0 0.0
    %145 = vmatprep.subr.mxu0 0.0
    %146 = vmatpush1.msra.mxu0 0.0
    %147 = vmatprep.subr.mxu0 0.0
    %148 = vmatpush1.msra.mxu0 0.0
    %149 = vmatprep.subr.mxu0 0.0
    %150 = vmatpush1.msra.mxu0 0.0
    %151 = vmatprep.subr.mxu0 0.0
    %152 = vmatpush1.msra.mxu0 0.0
    %153 = vmatprep.subr.mxu0 0.0
    %154 = vmatpush1.msra.mxu0 0.0
    %155 = vmatprep.subr.mxu0 0.0
    %156 = vmatpush1.msra.mxu0 0.0
    %157 = vmatprep.subr.mxu0 0.0
    %158 = vmatpush1.msra.mxu0 0.0
    %159 = vmatprep.subr.mxu0 0.0
    %160 = vmatpush1.msra.mxu0 0.0
    %161 = vmatprep.subr.mxu0 0.0
    %162 = vmatpush1.msra.mxu0 0.0
    %163 = vmatprep.subr.mxu0 0.0
    %164 = vmatpush1.msra.mxu0 0.0
    %165 = vmatprep.mubr.f32.mxu0 0.0
    %166 = vmatmul.mubr.f32.gmra.mrb[0].mxu0 %v96
    %v167 = vpop.f32.mrb[0].mxu0
    %v168 = vadd.f32 %v92, %v167
    %v169 = vpop.f32.mrb[0].mxu0
    %170 = vmatprep.mubr.f32.mxu0 0.0
    %171 = vmatmul.mubr.f32.gmra.mrb[0].mxu0 %v99
    %v172 = vpop.f32.mrb[0].mxu0
    %v173 = vadd.f32 %v92, %v172
    %v174 = vpop.f32.mrb[0].mxu0
    %175 = vdwg.mxu0
    %v176 = vmax.f32 %v168, 0.0
    %v177 = vmax.f32 %v173, 0.0
    %v178 = vld [vmem:[#allocation6] sm:$0xff]
    %v179 = vld [vmem:[#allocation6 + $0x8] sm:$0xff]
    %v180 = vld [vmem:[#allocation6 + $0x10] sm:$0xff]
    %v181 = vld [vmem:[#allocation6 + $0x18] sm:$0xff]
    %v182 = vld [vmem:[#allocation6 + $0x20] sm:$0xff]
    %v183 = vld [vmem:[#allocation6 + $0x28] sm:$0xff]
    %v184 = vld [vmem:[#allocation6 + $0x30] sm:$0xff]
    %v185 = vld [vmem:[#allocation6 + $0x38] sm:$0xff]
    %v186 = vld [vmem:[#allocation6 + $0x40] sm:$0xff]
    %v187 = vld [vmem:[#allocation6 + $0x48] sm:$0xff]
    %v188 = vld [vmem:[#allocation6 + $0x50] sm:$0xff]
    %v189 = vld [vmem:[#allocation6 + $0x58] sm:$0xff]
    %v190 = vld [vmem:[#allocation6 + $0x60] sm:$0xff]
    %v191 = vld [vmem:[#allocation6 + $0x68] sm:$0xff]
    %v192 = vld [vmem:[#allocation6 + $0x70] sm:$0xff]
    %v193 = vld [vmem:[#allocation6 + $0x78] sm:$0xff]
    %v194 = vld [vmem:[%s4] sm:$0x1]
    %v196 = vlaneseq
    %v197 = vshrl.u32 %v196, 7
    %v198 = vsub.s32 0, %v197
    %v199 = vrot.slane %v194, %v198
    %201 = vmatprep.subr.mxu0 0.0
    %202 = vmatpush1.msra.mxu0 %v178
    %203 = vmatprep.subr.mxu0 0.0
    %204 = vmatpush1.msra.mxu0 %v179
    %205 = vmatprep.subr.mxu0 0.0
    %206 = vmatpush1.msra.mxu0 %v180
    %207 = vmatprep.subr.mxu0 0.0
    %208 = vmatpush1.msra.mxu0 %v181
    %209 = vmatprep.subr.mxu0 0.0
    %210 = vmatpush1.msra.mxu0 %v182
    %211 = vmatprep.subr.mxu0 0.0
    %212 = vmatpush1.msra.mxu0 %v183
    %213 = vmatprep.subr.mxu0 0.0
    %214 = vmatpush1.msra.mxu0 %v184
    %215 = vmatprep.subr.mxu0 0.0
    %216 = vmatpush1.msra.mxu0 %v185
    %217 = vmatprep.subr.mxu0 0.0
    %218 = vmatpush1.msra.mxu0 %v186
    %219 = vmatprep.subr.mxu0 0.0
    %220 = vmatpush1.msra.mxu0 %v187
    %221 = vmatprep.subr.mxu0 0.0
    %222 = vmatpush1.msra.mxu0 %v188
    %223 = vmatprep.subr.mxu0 0.0
    %224 = vmatpush1.msra.mxu0 %v189
    %225 = vmatprep.subr.mxu0 0.0
    %226 = vmatpush1.msra.mxu0 %v190
    %227 = vmatprep.subr.mxu0 0.0
    %228 = vmatpush1.msra.mxu0 %v191
    %229 = vmatprep.subr.mxu0 0.0
    %230 = vmatpush1.msra.mxu0 %v192
    %231 = vmatprep.subr.mxu0 0.0
    %232 = vmatpush1.msra.mxu0 %v193
    %233 = vmatprep.subr.mxu0 0.0
    %234 = vmatpush1.msra.mxu0 0.0
    %235 = vmatprep.subr.mxu0 0.0
    %236 = vmatpush1.msra.mxu0 0.0
    %237 = vmatprep.subr.mxu0 0.0
    %238 = vmatpush1.msra.mxu0 0.0
    %239 = vmatprep.subr.mxu0 0.0
    %240 = vmatpush1.msra.mxu0 0.0
    %241 = vmatprep.subr.mxu0 0.0
    %242 = vmatpush1.msra.mxu0 0.0
    %243 = vmatprep.subr.mxu0 0.0
    %244 = vmatpush1.msra.mxu0 0.0
    %245 = vmatprep.subr.mxu0 0.0
    %246 = vmatpush1.msra.mxu0 0.0
    %247 = vmatprep.subr.mxu0 0.0
    %248 = vmatpush1.msra.mxu0 0.0
    %249 = vmatprep.subr.mxu0 0.0
    %250 = vmatpush1.msra.mxu0 0.0
    %251 = vmatprep.subr.mxu0 0.0
    %252 = vmatpush1.msra.mxu0 0.0
    %253 = vmatprep.subr.mxu0 0.0
    %254 = vmatpush1.msra.mxu0 0.0
    %255 = vmatprep.subr.mxu0 0.0
    %256 = vmatpush1.msra.mxu0 0.0
    %257 = vmatprep.subr.mxu0 0.0
    %258 = vmatpush1.msra.mxu0 0.0
    %259 = vmatprep.subr.mxu0 0.0
    %260 = vmatpush1.msra.mxu0 0.0
    %261 = vmatprep.subr.mxu0 0.0
    %262 = vmatpush1.msra.mxu0 0.0
    %263 = vmatprep.subr.mxu0 0.0
    %264 = vmatpush1.msra.mxu0 0.0
    %265 = vmatprep.mubr.f32.mxu0 0.0
    %266 = vmatmul.mubr.f32.gmra.mrb[0].mxu0 %v176
    %v267 = vpop.f32.mrb[0].mxu0
    %v268 = vadd.f32 %v199, %v267
    %v269 = vpop.f32.mrb[0].mxu0
    %270 = vmatprep.mubr.f32.mxu0 0.0
    %271 = vmatmul.mubr.f32.gmra.mrb[0].mxu0 %v177
    %v272 = vpop.f32.mrb[0].mxu0
    %v273 = vadd.f32 %v199, %v272
    %v274 = vpop.f32.mrb[0].mxu0
    %275 = vdwg.mxu0
    %v276 = vmax.f32 %v268, 0.0
    %v277 = vmax.f32 %v273, 0.0
    %v278 = vld [vmem:[#allocation7] sm:$0xff]
    %v279 = vld [vmem:[#allocation7 + $0x8] sm:$0xff]
    %v280 = vld [vmem:[#allocation7 + $0x10] sm:$0xff]
    %v281 = vld [vmem:[#allocation7 + $0x18] sm:$0xff]
    %v282 = vld [vmem:[#allocation7 + $0x20] sm:$0xff]
    %v283 = vld [vmem:[#allocation7 + $0x28] sm:$0xff]
    %v284 = vld [vmem:[#allocation7 + $0x30] sm:$0xff]
    %v285 = vld [vmem:[#allocation7 + $0x38] sm:$0xff]
    %v286 = vld [vmem:[#allocation7 + $0x40] sm:$0xff]
    %v287 = vld [vmem:[#allocation7 + $0x48] sm:$0xff]
    %v288 = vld [vmem:[#allocation7 + $0x50] sm:$0xff]
    %v289 = vld [vmem:[#allocation7 + $0x58] sm:$0xff]
    %v290 = vld [vmem:[#allocation7 + $0x60] sm:$0xff]
    %v291 = vld [vmem:[#allocation7 + $0x68] sm:$0xff]
    %v292 = vld [vmem:[#allocation7 + $0x70] sm:$0xff]
    %v293 = vld [vmem:[#allocation7 + $0x78] sm:$0xff]
    %v294 = vld [vmem:[%s6] sm:$0x1]
    %v296 = vlaneseq
    %v297 = vshrl.u32 %v296, 7
    %v298 = vsub.s32 0, %v297
    %v299 = vrot.slane %v294, %v298
    %301 = vmatprep.subr.mxu0 0.0
    %302 = vmatpush1.msra.mxu0 %v278
    %303 = vmatprep.subr.mxu0 0.0
    %304 = vmatpush1.msra.mxu0 %v279
    %305 = vmatprep.subr.mxu0 0.0
    %306 = vmatpush1.msra.mxu0 %v280
    %307 = vmatprep.subr.mxu0 0.0
    %308 = vmatpush1.msra.mxu0 %v281
    %309 = vmatprep.subr.mxu0 0.0
    %310 = vmatpush1.msra.mxu0 %v282
    %311 = vmatprep.subr.mxu0 0.0
    %312 = vmatpush1.msra.mxu0 %v283
    %313 = vmatprep.subr.mxu0 0.0
    %314 = vmatpush1.msra.mxu0 %v284
    %315 = vmatprep.subr.mxu0 0.0
    %316 = vmatpush1.msra.mxu0 %v285
    %317 = vmatprep.subr.mxu0 0.0
    %318 = vmatpush1.msra.mxu0 %v286
    %319 = vmatprep.subr.mxu0 0.0
    %320 = vmatpush1.msra.mxu0 %v287
    %321 = vmatprep.subr.mxu0 0.0
    %322 = vmatpush1.msra.mxu0 %v288
    %323 = vmatprep.subr.mxu0 0.0
    %324 = vmatpush1.msra.mxu0 %v289
    %325 = vmatprep.subr.mxu0 0.0
    %326 = vmatpush1.msra.mxu0 %v290
    %327 = vmatprep.subr.mxu0 0.0
    %328 = vmatpush1.msra.mxu0 %v291
    %329 = vmatprep.subr.mxu0 0.0
    %330 = vmatpush1.msra.mxu0 %v292
    %331 = vmatprep.subr.mxu0 0.0
    %332 = vmatpush1.msra.mxu0 %v293
    %333 = vmatprep.subr.mxu0 0.0
    %334 = vmatpush1.msra.mxu0 0.0
    %335 = vmatprep.subr.mxu0 0.0
    %336 = vmatpush1.msra.mxu0 0.0
    %337 = vmatprep.subr.mxu0 0.0
    %338 = vmatpush1.msra.mxu0 0.0
    %339 = vmatprep.subr.mxu0 0.0
    %340 = vmatpush1.msra.mxu0 0.0
    %341 = vmatprep.subr.mxu0 0.0
    %342 = vmatpush1.msra.mxu0 0.0
    %343 = vmatprep.subr.mxu0 0.0
    %344 = vmatpush1.msra.mxu0 0.0
    %345 = vmatprep.subr.mxu0 0.0
    %346 = vmatpush1.msra.mxu0 0.0
    %347 = vmatprep.subr.mxu0 0.0
    %348 = vmatpush1.msra.mxu0 0.0
    %349 = vmatprep.subr.mxu0 0.0
    %350 = vmatpush1.msra.mxu0 0.0
    %351 = vmatprep.subr.mxu0 0.0
    %352 = vmatpush1.msra.mxu0 0.0
    %353 = vmatprep.subr.mxu0 0.0
    %354 = vmatpush1.msra.mxu0 0.0
    %355 = vmatprep.subr.mxu0 0.0
    %356 = vmatpush1.msra.mxu0 0.0
    %357 = vmatprep.subr.mxu0 0.0
    %358 = vmatpush1.msra.mxu0 0.0
    %359 = vmatprep.subr.mxu0 0.0
    %360 = vmatpush1.msra.mxu0 0.0
    %361 = vmatprep.subr.mxu0 0.0
    %362 = vmatpush1.msra.mxu0 0.0
    %363 = vmatprep.subr.mxu0 0.0
    %364 = vmatpush1.msra.mxu0 0.0
    %365 = vmatprep.mubr.f32.mxu0 0.0
    %366 = vmatmul.mubr.f32.gmra.mrb[0].mxu0 %v276
    %v367 = vpop.f32.mrb[0].mxu0
    %v368 = vadd.f32 %v299, %v367
    %v369 = vpop.f32.mrb[0].mxu0
    %370 = vmatprep.mubr.f32.mxu0 0.0
    %371 = vmatmul.mubr.f32.gmra.mrb[0].mxu0 %v277
    %v372 = vpop.f32.mrb[0].mxu0
    %v373 = vadd.f32 %v299, %v372
    %v374 = vpop.f32.mrb[0].mxu0
    %375 = vdwg.mxu0
    %376 = vst [vmem:[%s7] sm:$0xff] %v368
    %377 = vst [vmem:[%s7 + $0x8] sm:$0xff] %v373
    // Predicated region
    $region46: #{_mlp_forward.1} parent=1 // pred_check
      _
    $region47: #{_mlp_forward.1} parent=1 // pred_check_branch
      %379 = sbr.rel (0) target = $region49
    $region48: #{_mlp_forward.1} parent=1 // pred_region
      _
    $region49: #{_mlp_forward.1} parent=1 // pred_fallthru
      _
    // Predicated region
    $region50: #{_mlp_forward.1} parent=1 // pred_check
      _
    $region51: #{_mlp_forward.1} parent=1 // pred_check_branch
      %381 = sbr.rel (0) target = $region53
    $region52: #{_mlp_forward.1} parent=1 // pred_region
      _
    $region53: #{_mlp_forward.1} parent=1 // pred_fallthru
      _
    %382 = vsyncpa [#allocation3], 1
    %383 = vsyncpa [#allocation5], 1
    %384 = vsyncpa [#allocation8], 1

</llo_original>
